<compile_context>
chip_gen: v6e
topology: v6e:2x2x1
jax: 0.10.0
libtpu: 0.0.40
codegen_flags: <defaults>
</compile_context>

<pallas_src>
import functools

import jax
import jax.numpy as jnp
from jax.experimental import pallas as pl
from jax.experimental.pallas import tpu as pltpu


# ----------------------------------------------------------------------------
# Model configuration (small, synthetic).
# ----------------------------------------------------------------------------
LATENT_DIM = 16
AUX_DIM = 4
IN_DIM = LATENT_DIM + AUX_DIM        # 20
H1, H2 = 32, 32                      # lin_layer_sizes
OUTPUT_DIM = 8                       # continuous head
CAT_OUTPUT_DIM = (3, 5)              # two categorical heads
BATCH = 2

C0, C1 = CAT_OUTPUT_DIM
TOTAL_OUT = OUTPUT_DIM + C0 + C1     # 16 real output columns
PAD_OUT = 128                        # lane-dense padded output width


def _round_up(n, m):
    return ((n + m - 1) // m) * m


def _cdiv(a, b):
    return -(-a // b)


# ----------------------------------------------------------------------------
# Pallas kernel: full Generator forward on one (bt, *) batch tile.
#   refs: xin (bt,20), w1 (20,32), w2 (32,32), wh (32,128),
#         b1 (1,32), b2 (1,32), bh (1,128), out (bt,128)
# ----------------------------------------------------------------------------
def generator_kernel(xin_ref, w1_ref, w2_ref, wh_ref,
                     b1_ref, b2_ref, bh_ref, out_ref):
    f32 = jnp.float32
    bf16 = jnp.bfloat16

    x = xin_ref[...]                                         # (bt, IN_DIM) f32

    # Hidden layer 1 — bf16 MXU operands, f32 accumulate, f32 elementwise.
    h = jnp.dot(x.astype(bf16), w1_ref[...].astype(bf16),
                preferred_element_type=f32)
    h = jnp.maximum(h + b1_ref[...], 0.0)

    # Hidden layer 2.
    h = jnp.dot(h.astype(bf16), w2_ref[...].astype(bf16),
                preferred_element_type=f32)
    h = jnp.maximum(h + b2_ref[...], 0.0)

    # Fused output heads: one MXU push produces all (padded) output lanes.
    head = jnp.dot(h.astype(bf16), wh_ref[...].astype(bf16),
                   preferred_element_type=f32) + bh_ref[...]   # (bt, 128)

    # Segment masks from a (1, 128) lane iota: identical in every row, so the
    # compares/ANDs touch a handful of vregs and broadcast for free in the
    # wheres below (no full (bt, 128) iota).
    lane = jax.lax.broadcasted_iota(jnp.int32, (1, PAD_OUT), 1)
    seg0 = (lane >= OUTPUT_DIM) & (lane < OUTPUT_DIM + C0)
    seg1 = (lane >= OUTPUT_DIM + C0) & (lane < TOTAL_OUT)

    m0 = jnp.max(jnp.where(seg0, head, -jnp.inf), axis=1, keepdims=True)
    m1 = jnp.max(jnp.where(seg1, head, -jnp.inf), axis=1, keepdims=True)
    # Non-categorical lanes use shift = head, so exp(0) = 1 there (no overflow
    # from large continuous logits); those lanes are masked out of s0/s1 and of
    # the final output anyway.
    shift = jnp.where(seg0, m0, jnp.where(seg1, m1, head))
    e = jnp.exp(head - shift)
    s0 = jnp.sum(jnp.where(seg0, e, 0.0), axis=1, keepdims=True)
    s1 = jnp.sum(jnp.where(seg1, e, 0.0), axis=1, keepdims=True)

    # EUP approximate reciprocal + one Newton step: softmax rows sum to 1 to
    # ~1e-6 while keeping the divide off the VPU critical path.
    r0 = pl.reciprocal(s0, approx=True)
    r0 = r0 * (2.0 - s0 * r0)
    r1 = pl.reciprocal(s1, approx=True)
    r1 = r1 * (2.0 - s1 * r1)

    out = jnp.where(lane < OUTPUT_DIM, head,
          jnp.where(seg0, e * r0,
          jnp.where(seg1, e * r1, 0.0)))
    out_ref[...] = out                                       # one unmasked store


# ----------------------------------------------------------------------------
# Wrapper: adaptive batch grid + pallas_call.
# ----------------------------------------------------------------------------
@functools.partial(jax.jit, static_argnames=("block_batch_cap",))
def generator_forward(x, aux_x, params, *, block_batch_cap=4096):
    w1, w2, wh, b1, b2, bh = params
    b = x.shape[0]

    # Fold concat([x, aux_x]) here (one tiny HBM pass) so the kernel sees one
    # input stream and does a single layer-1 matmul.
    xin = jnp.concatenate([x, aux_x], axis=1)                # (B, IN_DIM)

    # Adaptive tile: as big as possible (HBM-roofline regime, still far under
    # VMEM limits: ~2 MB/buffer at bt=4096), without computing up to 2x wasted
    # rows; >=2 grid steps on big batches so "parallel" shards over v7x's TCs.
    nb = max(1, _cdiv(b, block_batch_cap))
    if b >= 1024:
        nb = max(nb, 2)
    bt = _round_up(_cdiv(b, nb), 8)
    b_pad = nb * bt
    if b_pad != b:
        xin = jnp.pad(xin, ((0, b_pad - b), (0, 0)))

    out = pl.pallas_call(
        generator_kernel,
        out_shape=jax.ShapeDtypeStruct((b_pad, PAD_OUT), jnp.float32),
        grid_spec=pltpu.PrefetchScalarGridSpec(
            num_scalar_prefetch=0,
            grid=(nb,),
            in_specs=[
                pl.BlockSpec((bt, IN_DIM), lambda i: (i, 0)),
                pl.BlockSpec(w1.shape, lambda i: (0, 0)),    # resident weights
                pl.BlockSpec(w2.shape, lambda i: (0, 0)),
                pl.BlockSpec(wh.shape, lambda i: (0, 0)),
                pl.BlockSpec(b1.shape, lambda i: (0, 0)),    # lane-0-aligned biases
                pl.BlockSpec(b2.shape, lambda i: (0, 0)),
                pl.BlockSpec(bh.shape, lambda i: (0, 0)),
            ],
            out_specs=pl.BlockSpec((bt, PAD_OUT), lambda i: (i, 0)),
        ),
        compiler_params=pltpu.CompilerParams(
            dimension_semantics=("parallel",)),
    )(xin, w1, w2, wh, b1, b2, bh)

    # Un-pad batch rows and lane padding.
    return out[:b, :TOTAL_OUT]


# ----------------------------------------------------------------------------
# Deterministic parameter init (mimics nn.Linear uniform(-1/sqrt(fan_in), .)).
# Weights stored transposed (fan_in, fan_out) so the kernel does x @ W.
# Heads fused + lane-padded; biases kept as three separate lane-0 refs.
# ----------------------------------------------------------------------------
def _linear_params(key, fan_in, fan_out):
    kw, kb = jax.random.split(key)
    bound = 1.0 / jnp.sqrt(fan_in)
    w = jax.random.uniform(kw, (fan_in, fan_out), jnp.float32, -bound, bound)
    b = jax.random.uniform(kb, (1, fan_out), jnp.float32, -bound, bound)
    return w, b


def make_params(key):
    keys = jax.random.split(key, 5)
    w1, b1 = _linear_params(keys[0], IN_DIM, H1)
    w2, b2 = _linear_params(keys[1], H1, H2)
    wo, bo = _linear_params(keys[2], H2, OUTPUT_DIM)
    wc0, bc0 = _linear_params(keys[3], H2, C0)
    wc1, bc1 = _linear_params(keys[4], H2, C1)

    # Fuse heads and pad to a full 128-lane block (zero columns beyond 16).
    wh = jnp.concatenate([wo, wc0, wc1], axis=1)             # (H2, 16)
    bh = jnp.concatenate([bo, bc0, bc1], axis=1)             # (1, 16)
    wh = jnp.pad(wh, ((0, 0), (0, PAD_OUT - TOTAL_OUT)))     # (H2, 128)
    bh = jnp.pad(bh, ((0, 0), (0, PAD_OUT - TOTAL_OUT)))     # (1, 128)

    return (w1, w2, wh, b1, b2, bh)


# ----------------------------------------------------------------------------
# Pure-JAX reference (same math as the PyTorch module, using fused params).
# matmul_dtype=f32 reproduces the PyTorch f32 forward; matmul_dtype=bf16
# matches the kernel's MXU operand precision bit-for-bit (f32 accumulate).
# ----------------------------------------------------------------------------
def reference_forward(x, aux_x, params, matmul_dtype=jnp.float32):
    w1, w2, wh, b1, b2, bh = params

    def mm(a, w):
        return jnp.dot(a.astype(matmul_dtype), w.astype(matmul_dtype),
                       preferred_element_type=jnp.float32)

    h = jnp.concatenate([x, aux_x], axis=1)
    h = jax.nn.relu(mm(h, w1) + b1)
    h = jax.nn.relu(mm(h, w2) + b2)
    head = mm(h, wh) + bh
    x_cont = head[:, :OUTPUT_DIM]
    x_cat0 = jax.nn.softmax(head[:, OUTPUT_DIM:OUTPUT_DIM + C0], axis=1)
    x_cat1 = jax.nn.softmax(head[:, OUTPUT_DIM + C0:TOTAL_OUT], axis=1)
    return jnp.concatenate([x_cont, x_cat0, x_cat1], axis=1)


if __name__ == "__main__":
    key = jax.random.PRNGKey(0)
    k_params, k_x, k_aux = jax.random.split(key, 3)

    params = make_params(k_params)
    x = jax.random.normal(k_x, (BATCH, LATENT_DIM), jnp.float32)
    aux_x = jax.random.normal(k_aux, (BATCH, AUX_DIM), jnp.float32)

    out = generator_forward(x, aux_x, params)
    out = jax.block_until_ready(out)
    assert out.shape == (BATCH, TOTAL_OUT)

    # Tight check: same bf16-operand / f32-accumulate math as the kernel.
    ref_bf16 = reference_forward(x, aux_x, params, matmul_dtype=jnp.bfloat16)
    assert jnp.allclose(out, ref_bf16, atol=2e-3, rtol=2e-3), \
        "mismatch vs bf16-operand reference"

    # Loose check: the PyTorch-equivalent full-f32 forward (bf16 MXU operand
    # rounding is the only source of difference).
    ref_f32 = reference_forward(x, aux_x, params, matmul_dtype=jnp.float32)
    assert jnp.allclose(out, ref_f32, atol=5e-2, rtol=5e-2), \
        "mismatch vs f32 reference"

    # Each categorical softmax row must sum to ~1 (Newton-refined reciprocal).
    cat0 = out[:, OUTPUT_DIM:OUTPUT_DIM + C0]
    cat1 = out[:, OUTPUT_DIM + C0:TOTAL_OUT]
    assert jnp.allclose(cat0.sum(axis=1), 1.0, atol=1e-4)
    assert jnp.allclose(cat1.sum(axis=1), 1.0, atol=1e-4)

    print("KERNEL_OK")
</pallas_src>

<mosaic_0001>
module attributes {stable_mosaic.version = 11 : i64} {
  func.func @generator_kernel(%arg0: i32, %arg1: memref<8x20xf32, #tpu.memory_space<vmem>>, %arg2: memref<20x32xf32, #tpu.memory_space<vmem>>, %arg3: memref<32x32xf32, #tpu.memory_space<vmem>>, %arg4: memref<32x128xf32, #tpu.memory_space<vmem>>, %arg5: memref<1x32xf32, #tpu.memory_space<vmem>>, %arg6: memref<1x32xf32, #tpu.memory_space<vmem>>, %arg7: memref<1x128xf32, #tpu.memory_space<vmem>>, %arg8: memref<8x128xf32, #tpu.memory_space<vmem>>) attributes {dimension_semantics = [#tpu.dimension_semantics<parallel>], iteration_bounds = array<i64: 1>, scalar_prefetch = 0 : i64, scratch_operands = 0 : i64, tpu.core_type = #tpu.core_type<tc>, window_params = [{transform_indices = @transform_0, window_bounds = array<i64: 8, 20>}, {pipeline_mode = #tpu.pipeline_mode<synchronous>, transform_indices = @transform_1, window_bounds = array<i64: 20, 32>}, {pipeline_mode = #tpu.pipeline_mode<synchronous>, transform_indices = @transform_2, window_bounds = array<i64: 32, 32>}, {pipeline_mode = #tpu.pipeline_mode<synchronous>, transform_indices = @transform_3, window_bounds = array<i64: 32, 128>}, {pipeline_mode = #tpu.pipeline_mode<synchronous>, transform_indices = @transform_4, window_bounds = array<i64: 1, 32>}, {pipeline_mode = #tpu.pipeline_mode<synchronous>, transform_indices = @transform_5, window_bounds = array<i64: 1, 32>}, {pipeline_mode = #tpu.pipeline_mode<synchronous>, transform_indices = @transform_6, window_bounds = array<i64: 1, 128>}, {transform_indices = @transform_7, window_bounds = array<i64: 8, 128>}]} {
    %c0 = arith.constant 0 : index
    %c0_0 = arith.constant 0 : index
    %0 = vector.load %arg1[%c0, %c0_0] : memref<8x20xf32, #tpu.memory_space<vmem>>, vector<8x20xf32>
    %1 = arith.truncf %0 : vector<8x20xf32> to vector<8x20xbf16>
    %c0_1 = arith.constant 0 : index
    %c0_2 = arith.constant 0 : index
    %2 = vector.load %arg2[%c0_1, %c0_2] : memref<20x32xf32, #tpu.memory_space<vmem>>, vector<20x32xf32>
    %3 = arith.truncf %2 : vector<20x32xf32> to vector<20x32xbf16>
    %cst = arith.constant dense<0.000000e+00> : vector<8x32xf32>
    %4 = tpu.matmul %1, %3, %cst {dimension_numbers = #tpu.dot_dimension_numbers<[1], [0], [0], [1], [0, 0, 1, 1], [], []>} : vector<8x20xbf16>, vector<20x32xbf16>, vector<8x32xf32> -> vector<8x32xf32>
    %c0_3 = arith.constant 0 : index
    %c0_4 = arith.constant 0 : index
    %5 = vector.load %arg5[%c0_3, %c0_4] : memref<1x32xf32, #tpu.memory_space<vmem>>, vector<1x32xf32>
    %6 = vector.broadcast %5 : vector<1x32xf32> to vector<8x32xf32>
    %7 = arith.addf %4, %6 : vector<8x32xf32>
    %cst_5 = arith.constant 0.000000e+00 : f32
    %8 = vector.broadcast %cst_5 : f32 to vector<8x32xf32>
    %9 = arith.maximumf %7, %8 : vector<8x32xf32>
    %10 = arith.truncf %9 : vector<8x32xf32> to vector<8x32xbf16>
    %c0_6 = arith.constant 0 : index
    %c0_7 = arith.constant 0 : index
    %11 = vector.load %arg3[%c0_6, %c0_7] : memref<32x32xf32, #tpu.memory_space<vmem>>, vector<32x32xf32>
    %12 = arith.truncf %11 : vector<32x32xf32> to vector<32x32xbf16>
    %cst_8 = arith.constant dense<0.000000e+00> : vector<8x32xf32>
    %13 = tpu.matmul %10, %12, %cst_8 {dimension_numbers = #tpu.dot_dimension_numbers<[1], [0], [0], [1], [0, 0, 1, 1], [], []>} : vector<8x32xbf16>, vector<32x32xbf16>, vector<8x32xf32> -> vector<8x32xf32>
    %c0_9 = arith.constant 0 : index
    %c0_10 = arith.constant 0 : index
    %14 = vector.load %arg6[%c0_9, %c0_10] : memref<1x32xf32, #tpu.memory_space<vmem>>, vector<1x32xf32>
    %15 = vector.broadcast %14 : vector<1x32xf32> to vector<8x32xf32>
    %16 = arith.addf %13, %15 : vector<8x32xf32>
    %cst_11 = arith.constant 0.000000e+00 : f32
    %17 = vector.broadcast %cst_11 : f32 to vector<8x32xf32>
    %18 = arith.maximumf %16, %17 : vector<8x32xf32>
    %19 = arith.truncf %18 : vector<8x32xf32> to vector<8x32xbf16>
    %c0_12 = arith.constant 0 : index
    %c0_13 = arith.constant 0 : index
    %20 = vector.load %arg4[%c0_12, %c0_13] : memref<32x128xf32, #tpu.memory_space<vmem>>, vector<32x128xf32>
    %21 = arith.truncf %20 : vector<32x128xf32> to vector<32x128xbf16>
    %cst_14 = arith.constant dense<0.000000e+00> : vector<8x128xf32>
    %22 = tpu.matmul %19, %21, %cst_14 {dimension_numbers = #tpu.dot_dimension_numbers<[1], [0], [0], [1], [0, 0, 1, 1], [], []>} : vector<8x32xbf16>, vector<32x128xbf16>, vector<8x128xf32> -> vector<8x128xf32>
    %c0_15 = arith.constant 0 : index
    %c0_16 = arith.constant 0 : index
    %23 = vector.load %arg7[%c0_15, %c0_16] : memref<1x128xf32, #tpu.memory_space<vmem>>, vector<1x128xf32>
    %24 = vector.broadcast %23 : vector<1x128xf32> to vector<8x128xf32>
    %25 = arith.addf %22, %24 : vector<8x128xf32>
    %26 = tpu.iota {dimensions = array<i32: 1>} : vector<1x128xi32>
    %c8_i32 = arith.constant 8 : i32
    %27 = vector.broadcast %c8_i32 : i32 to vector<1x128xi32>
    %28 = arith.cmpi sge, %26, %27 : vector<1x128xi32>
    %c11_i32 = arith.constant 11 : i32
    %29 = vector.broadcast %c11_i32 : i32 to vector<1x128xi32>
    %30 = arith.cmpi slt, %26, %29 : vector<1x128xi32>
    %31 = arith.andi %28, %30 : vector<1x128xi1>
    %c11_i32_17 = arith.constant 11 : i32
    %32 = vector.broadcast %c11_i32_17 : i32 to vector<1x128xi32>
    %33 = arith.cmpi sge, %26, %32 : vector<1x128xi32>
    %c16_i32 = arith.constant 16 : i32
    %34 = vector.broadcast %c16_i32 : i32 to vector<1x128xi32>
    %35 = arith.cmpi slt, %26, %34 : vector<1x128xi32>
    %36 = arith.andi %33, %35 : vector<1x128xi1>
    %cst_18 = arith.constant 0xFF800000 : f32
    %37 = vector.shape_cast %31 : vector<1x128xi1> to vector<1x128xi1>
    %38 = vector.broadcast %37 : vector<1x128xi1> to vector<8x128xi1>
    %39 = vector.broadcast %cst_18 : f32 to vector<8x128xf32>
    %40 = arith.select %38, %25, %39 : vector<8x128xi1>, vector<8x128xf32>
    %cst_19 = arith.constant dense<0xFF800000> : vector<8xf32>
    %41 = vector.multi_reduction <maximumf>, %40, %cst_19 [1] : vector<8x128xf32> to vector<8xf32>
    %42 = vector.shape_cast %41 : vector<8xf32> to vector<8x1xf32>
    %cst_20 = arith.constant 0xFF800000 : f32
    %43 = vector.shape_cast %36 : vector<1x128xi1> to vector<1x128xi1>
    %44 = vector.broadcast %43 : vector<1x128xi1> to vector<8x128xi1>
    %45 = vector.broadcast %cst_20 : f32 to vector<8x128xf32>
    %46 = arith.select %44, %25, %45 : vector<8x128xi1>, vector<8x128xf32>
    %cst_21 = arith.constant dense<0xFF800000> : vector<8xf32>
    %47 = vector.multi_reduction <maximumf>, %46, %cst_21 [1] : vector<8x128xf32> to vector<8xf32>
    %48 = vector.shape_cast %47 : vector<8xf32> to vector<8x1xf32>
    %49 = vector.shape_cast %36 : vector<1x128xi1> to vector<1x128xi1>
    %50 = vector.broadcast %49 : vector<1x128xi1> to vector<8x128xi1>
    %51 = vector.shape_cast %48 : vector<8x1xf32> to vector<8x1xf32>
    %52 = vector.broadcast %51 : vector<8x1xf32> to vector<8x128xf32>
    %53 = arith.select %50, %52, %25 : vector<8x128xi1>, vector<8x128xf32>
    %54 = vector.shape_cast %31 : vector<1x128xi1> to vector<1x128xi1>
    %55 = vector.broadcast %54 : vector<1x128xi1> to vector<8x128xi1>
    %56 = vector.shape_cast %42 : vector<8x1xf32> to vector<8x1xf32>
    %57 = vector.broadcast %56 : vector<8x1xf32> to vector<8x128xf32>
    %58 = arith.select %55, %57, %53 : vector<8x128xi1>, vector<8x128xf32>
    %59 = arith.subf %25, %58 : vector<8x128xf32>
    %60 = math.exp %59 : vector<8x128xf32>
    %cst_22 = arith.constant 0.000000e+00 : f32
    %61 = vector.shape_cast %31 : vector<1x128xi1> to vector<1x128xi1>
    %62 = vector.broadcast %61 : vector<1x128xi1> to vector<8x128xi1>
    %63 = vector.broadcast %cst_22 : f32 to vector<8x128xf32>
    %64 = arith.select %62, %60, %63 : vector<8x128xi1>, vector<8x128xf32>
    %cst_23 = arith.constant dense<0.000000e+00> : vector<8xf32>
    %65 = vector.multi_reduction <add>, %64, %cst_23 [1] : vector<8x128xf32> to vector<8xf32>
    %66 = vector.shape_cast %65 : vector<8xf32> to vector<8x1xf32>
    %cst_24 = arith.constant 0.000000e+00 : f32
    %67 = vector.shape_cast %36 : vector<1x128xi1> to vector<1x128xi1>
    %68 = vector.broadcast %67 : vector<1x128xi1> to vector<8x128xi1>
    %69 = vector.broadcast %cst_24 : f32 to vector<8x128xf32>
    %70 = arith.select %68, %60, %69 : vector<8x128xi1>, vector<8x128xf32>
    %cst_25 = arith.constant dense<0.000000e+00> : vector<8xf32>
    %71 = vector.multi_reduction <add>, %70, %cst_25 [1] : vector<8x128xf32> to vector<8xf32>
    %72 = vector.shape_cast %71 : vector<8xf32> to vector<8x1xf32>
    %73 = tpu.reciprocal %66 {approx = true} : vector<8x1xf32> -> vector<8x1xf32>
    %74 = arith.mulf %66, %73 : vector<8x1xf32>
    %cst_26 = arith.constant 2.000000e+00 : f32
    %75 = vector.broadcast %cst_26 : f32 to vector<8x1xf32>
    %76 = arith.subf %75, %74 : vector<8x1xf32>
    %77 = arith.mulf %73, %76 : vector<8x1xf32>
    %78 = tpu.reciprocal %72 {approx = true} : vector<8x1xf32> -> vector<8x1xf32>
    %79 = arith.mulf %72, %78 : vector<8x1xf32>
    %cst_27 = arith.constant 2.000000e+00 : f32
    %80 = vector.broadcast %cst_27 : f32 to vector<8x1xf32>
    %81 = arith.subf %80, %79 : vector<8x1xf32>
    %82 = arith.mulf %78, %81 : vector<8x1xf32>
    %c8_i32_28 = arith.constant 8 : i32
    %83 = vector.broadcast %c8_i32_28 : i32 to vector<1x128xi32>
    %84 = arith.cmpi slt, %26, %83 : vector<1x128xi32>
    %85 = vector.broadcast %77 : vector<8x1xf32> to vector<8x128xf32>
    %86 = arith.mulf %60, %85 : vector<8x128xf32>
    %87 = vector.broadcast %82 : vector<8x1xf32> to vector<8x128xf32>
    %88 = arith.mulf %60, %87 : vector<8x128xf32>
    %cst_29 = arith.constant 0.000000e+00 : f32
    %89 = vector.shape_cast %36 : vector<1x128xi1> to vector<1x128xi1>
    %90 = vector.broadcast %89 : vector<1x128xi1> to vector<8x128xi1>
    %91 = vector.broadcast %cst_29 : f32 to vector<8x128xf32>
    %92 = arith.select %90, %88, %91 : vector<8x128xi1>, vector<8x128xf32>
    %93 = vector.shape_cast %31 : vector<1x128xi1> to vector<1x128xi1>
    %94 = vector.broadcast %93 : vector<1x128xi1> to vector<8x128xi1>
    %95 = arith.select %94, %86, %92 : vector<8x128xi1>, vector<8x128xf32>
    %96 = vector.shape_cast %84 : vector<1x128xi1> to vector<1x128xi1>
    %97 = vector.broadcast %96 : vector<1x128xi1> to vector<8x128xi1>
    %98 = arith.select %97, %25, %95 : vector<8x128xi1>, vector<8x128xf32>
    %c0_30 = arith.constant 0 : index
    %c0_31 = arith.constant 0 : index
    %99 = vector.load %arg8[%c0_30, %c0_31] : memref<8x128xf32, #tpu.memory_space<vmem>>, vector<8x128xf32>
    tpu.vector_store %arg8[%c0_30, %c0_31], %98 {strides = array<i32>} : memref<8x128xf32, #tpu.memory_space<vmem>>, vector<8x128xf32>,
    return
  }
  func.func @transform_0(%arg0: i32) -> (i32, i32) {
    %c0_i32 = arith.constant 0 : i32
    %c0_i32_0 = arith.constant 0 : i32
    return %arg0, %c0_i32 : i32, i32
  }
  func.func @transform_1(%arg0: i32) -> (i32, i32) {
    %c0_i32 = arith.constant 0 : i32
    %c0_i32_0 = arith.constant 0 : i32
    %c0_i32_1 = arith.constant 0 : i32
    return %c0_i32, %c0_i32_0 : i32, i32
  }
  func.func @transform_2(%arg0: i32) -> (i32, i32) {
    %c0_i32 = arith.constant 0 : i32
    %c0_i32_0 = arith.constant 0 : i32
    %c0_i32_1 = arith.constant 0 : i32
    return %c0_i32, %c0_i32_0 : i32, i32
  }
  func.func @transform_3(%arg0: i32) -> (i32, i32) {
    %c0_i32 = arith.constant 0 : i32
    %c0_i32_0 = arith.constant 0 : i32
    %c0_i32_1 = arith.constant 0 : i32
    return %c0_i32, %c0_i32_0 : i32, i32
  }
  func.func @transform_4(%arg0: i32) -> (i32, i32) {
    %c0_i32 = arith.constant 0 : i32
    %c0_i32_0 = arith.constant 0 : i32
    %c0_i32_1 = arith.constant 0 : i32
    return %c0_i32, %c0_i32_0 : i32, i32
  }
  func.func @transform_5(%arg0: i32) -> (i32, i32) {
    %c0_i32 = arith.constant 0 : i32
    %c0_i32_0 = arith.constant 0 : i32
    %c0_i32_1 = arith.constant 0 : i32
    return %c0_i32, %c0_i32_0 : i32, i32
  }
  func.func @transform_6(%arg0: i32) -> (i32, i32) {
    %c0_i32 = arith.constant 0 : i32
    %c0_i32_0 = arith.constant 0 : i32
    %c0_i32_1 = arith.constant 0 : i32
    return %c0_i32, %c0_i32_0 : i32, i32
  }
  func.func @transform_7(%arg0: i32) -> (i32, i32) {
    %c0_i32 = arith.constant 0 : i32
    %c0_i32_0 = arith.constant 0 : i32
    return %arg0, %c0_i32 : i32, i32
  }
}

</mosaic_0001>

<llo_original>
// kernel: generator_forward.1
$region0: #{generator_forward.1}
  #allocation0 [shape = 'u32[]', space=smem, size = 0x4, offset = 0x4, fixed_abs, tag = 'smem constant byte address 0x4 - core index']
  #allocation1 [shape = 'u32[144,128]{1,0:T(1,128)}', space=vmem, size = 0x12000, scoped, tag = 'internal scratch']
  %s0 = inlined_call_operand.vmem [shape: f32[8,20], index: 0, kind: input, shape index: {}]
  %s1 = inlined_call_operand.hbm [shape: f32[20,32], index: 1, kind: input, shape index: {}]
  %s2 = inlined_call_operand.hbm [shape: f32[32,32], index: 2, kind: input, shape index: {}]
  %s3 = inlined_call_operand.hbm [shape: f32[32,128], index: 3, kind: input, shape index: {}]
  %s4 = inlined_call_operand.vmem [shape: f32[1,32], index: 4, kind: input, shape index: {}]
  %s5 = inlined_call_operand.vmem [shape: f32[1,32], index: 5, kind: input, shape index: {}]
  %s6 = inlined_call_operand.vmem [shape: f32[1,128], index: 6, kind: input, shape index: {}]
  %s7 = inlined_call_operand.vmem [shape: f32[8,128], index: 7, kind: output, shape index: {}]
  %s8 = sld [smem:[#allocation0]]
  $region50: #{generator_forward.1} parent=0
    _
  %s10 = ssub.s32 1, %s8
  %s11 = scalar_select 0, %s10, %s8
  $region1: #{generator_forward.1} parent=0
    #allocation2 [shape = 'u8[12288]{0}', space=vmem, size = 0x3000, scoped, tag = 'input window, operand 1, single buffered']
    #allocation3 [shape = 's32[1]{0}', space=sflag, size = 0x4, scoped, tag = 'scoped memory for generator_forward.1']
    #allocation4 [shape = 'u8[16384]{0}', space=vmem, size = 0x4000, scoped, tag = 'input window, operand 2, single buffered']
    #allocation5 [shape = 's32[1]{0}', space=sflag, size = 0x4, scoped, tag = 'scoped memory for generator_forward.1']
    #allocation6 [shape = 'u8[16384]{0}', space=vmem, size = 0x4000, scoped, tag = 'input window, operand 3, single buffered']
    %12 = vsyncpa [#allocation3], 0
    %13 = vsyncpa [#allocation5], 0
    // Predicated region
    $region2: #{generator_forward.1} parent=1 // pred_check
      _
    $region3: #{generator_forward.1} parent=1 // pred_check_branch
      %15 = sbr.rel (0) target = $region5
    $region4: #{generator_forward.1} parent=1 // pred_region
      _
    $region5: #{generator_forward.1} parent=1 // pred_fallthru
      _
    // Predicated region
    $region6: #{generator_forward.1} parent=1 // pred_check
      _
    $region7: #{generator_forward.1} parent=1 // pred_check_branch
      %17 = sbr.rel (0) target = $region9
    $region8: #{generator_forward.1} parent=1 // pred_region
      %s19 = ssub.s32 384, 384
      %20 = vsyncadd [#allocation3], %s19
      %s21 = sshll.u32 [#allocation2], 4
      %s22 = int_to_ptr.vmem [resolvable:$true] %s21
      %27 = dma.hbm_to_vmem [thread:$0]  %s1, 384, %s22, [#allocation3], 128, 128, 8
    $region9: #{generator_forward.1} parent=1 // pred_fallthru
      _
    // Predicated region
    $region10: #{generator_forward.1} parent=1 // pred_check
      _
    $region11: #{generator_forward.1} parent=1 // pred_check_branch
      %29 = sbr.rel (0) target = $region13
    $region12: #{generator_forward.1} parent=1 // pred_region
      %s31 = ssub.s32 512, 512
      %32 = vsyncadd [#allocation5], %s31
      %s33 = sshll.u32 [#allocation4], 4
      %s34 = int_to_ptr.vmem [resolvable:$true] %s33
      %39 = dma.hbm_to_vmem [thread:$0]  %s2, 512, %s34, [#allocation5], 128, 128, 8
    $region13: #{generator_forward.1} parent=1 // pred_fallthru
      _
    // Predicated region
    $region14: #{generator_forward.1} parent=1 // pred_check
      _
    $region15: #{generator_forward.1} parent=1 // pred_check_branch
      %41 = sbr.rel (0) target = $region17
    $region16: #{generator_forward.1} parent=1 // pred_region
      %s43 = ssub.s32 512, 512
      %44 = vsyncadd [#allocation5], %s43
      %s45 = sshll.u32 [#allocation6], 4
      %s46 = int_to_ptr.vmem [resolvable:$true] %s45
      %51 = dma.hbm_to_vmem [thread:$0]  %s3, 512, %s46, [#allocation5], 128, 128, 8
    $region17: #{generator_forward.1} parent=1 // pred_fallthru
      _
    // Predicated region
    $region18: #{generator_forward.1} parent=1 // pred_check
      _
    $region19: #{generator_forward.1} parent=1 // pred_check_branch
      %53 = sbr.rel (0) target = $region21
    $region20: #{generator_forward.1} parent=1 // pred_region
      _
    $region21: #{generator_forward.1} parent=1 // pred_fallthru
      _
    // Predicated region
    $region22: #{generator_forward.1} parent=1 // pred_check
      _
    $region23: #{generator_forward.1} parent=1 // pred_check_branch
      %55 = sbr.rel (0) target = $region25
    $region24: #{generator_forward.1} parent=1 // pred_region
      _
    $region25: #{generator_forward.1} parent=1 // pred_fallthru
      _
    // Predicated region
    $region26: #{generator_forward.1} parent=1 // pred_check
      _
    $region27: #{generator_forward.1} parent=1 // pred_check_branch
      %57 = sbr.rel (0) target = $region29
    $region28: #{generator_forward.1} parent=1 // pred_region
      _
    $region29: #{generator_forward.1} parent=1 // pred_fallthru
      _
    // Predicated region
    $region30: #{generator_forward.1} parent=1 // pred_check
      _
    $region31: #{generator_forward.1} parent=1 // pred_check_branch
      %59 = sbr.rel (0) target = $region33
    $region32: #{generator_forward.1} parent=1 // pred_region
      %60 = dma.done [#allocation3], 384
    $region33: #{generator_forward.1} parent=1 // pred_fallthru
      _
    // Predicated region
    $region34: #{generator_forward.1} parent=1 // pred_check
      _
    $region35: #{generator_forward.1} parent=1 // pred_check_branch
      %62 = sbr.rel (0) target = $region37
    $region36: #{generator_forward.1} parent=1 // pred_region
      %63 = dma.done [#allocation5], 512
    $region37: #{generator_forward.1} parent=1 // pred_fallthru
      _
    // Predicated region
    $region38: #{generator_forward.1} parent=1 // pred_check
      _
    $region39: #{generator_forward.1} parent=1 // pred_check_branch
      %65 = sbr.rel (0) target = $region41
    $region40: #{generator_forward.1} parent=1 // pred_region
      %66 = dma.done [#allocation5], 512
    $region41: #{generator_forward.1} parent=1 // pred_fallthru
      _
    %v68 = vld [vmem:[%s0] sm:$0xff]
    %v69 = vpack.c.bf16 %v68, %v68
    %v70 = vld [vmem:[#allocation2] sm:$0xff]
    %v71 = vld [vmem:[#allocation2 + $0x8] sm:$0xff]
    %v72 = vld [vmem:[#allocation2 + $0x10] sm:$0xf]
    %v73 = vpack.c.bf16 %v71, %v70
    %v74 = vpack.c.bf16 %v72, %v72
    %v75 = vld [vmem:[%s4] sm:$0x1]
    %v77 = vlaneseq
    %v78 = vshrl.u32 %v77, 7
    %v79 = vsub.s32 0, %v78
    %v80 = vrot.slane %v75, %v79
    %vm82 = vcmask 162816
    %v84 = vsel %vm82, %v69, 0
    %vm86 = vcmask 1041408
    %v88 = vsel %vm86, %v74, 0
    %90 = vmatprep.subr.bf16.mxu0 0
    %91 = vmatpush1.bf16.msra.mxu0 0
    %92 = vmatprep.subr.bf16.mxu0 0
    %93 = vmatpush1.bf16.msra.mxu0 0
    %94 = vmatprep.subr.bf16.mxu0 0
    %95 = vmatpush1.bf16.msra.mxu0 0
    %96 = vmatprep.subr.bf16.mxu0 0
    %97 = vmatpush1.bf16.msra.mxu0 0
    %98 = vmatprep.subr.bf16.mxu0 0
    %99 = vmatpush1.bf16.msra.mxu0 0
    %100 = vmatprep.subr.bf16.mxu0 0
    %101 = vmatpush1.bf16.msra.mxu0 0
    %102 = vmatprep.subr.bf16.mxu0 0
    %103 = vmatpush1.bf16.msra.mxu0 %v88
    %104 = vmatprep.subr.bf16.mxu0 0
    %105 = vmatpush1.bf16.msra.mxu0 %v73
    %106 = vmatprep.subr.bf16.mxu0 0
    %107 = vmatpush2.bf16.msra.mxu0 0
    %108 = vmatprep.subr.bf16.mxu0 0
    %109 = vmatpush2.bf16.msra.mxu0 0
    %110 = vmatprep.subr.bf16.mxu0 0
    %111 = vmatpush2.bf16.msra.mxu0 0
    %112 = vmatprep.subr.bf16.mxu0 0
    %113 = vmatpush2.bf16.msra.mxu0 0
    %114 = vmatprep.subr.bf16.mxu0 0
    %115 = vmatpush2.bf16.msra.mxu0 0
    %116 = vmatprep.subr.bf16.mxu0 0
    %117 = vmatpush2.bf16.msra.mxu0 0
    %118 = vmatprep.subr.bf16.mxu0 0
    %119 = vmatpush2.bf16.msra.mxu0 0
    %120 = vmatprep.subr.bf16.mxu0 0
    %121 = vmatpush2.bf16.msra.mxu0 0
    %122 = vmatprep.mubr.bf16.mxu0 0
    %123 = vmatmul.mubr.bf16.gmra.mxu0 %v84
    %v124 = vpop.f32.mrf.mxu0
    %v125 = vadd.f32 %v80, %v124
    %v126 = vpop.f32.mrf.mxu0
    %v127 = vpop.f32.mrf.mxu0
    %v128 = vpop.f32.mrf.mxu0
    %129 = vdwg.mxu0
    %v130 = vmax.f32 %v125, 0.0
    %v131 = vpack.c.bf16 %v130, %v130
    %v132 = vld [vmem:[#allocation4] sm:$0xff]
    %v133 = vld [vmem:[#allocation4 + $0x8] sm:$0xff]
    %v134 = vld [vmem:[#allocation4 + $0x10] sm:$0xff]
    %v135 = vld [vmem:[#allocation4 + $0x18] sm:$0xff]
    %v136 = vpack.c.bf16 %v133, %v132
    %v137 = vpack.c.bf16 %v135, %v134
    %v138 = vld [vmem:[%s5] sm:$0x1]
    %v140 = vlaneseq
    %v141 = vshrl.u32 %v140, 7
    %v142 = vsub.s32 0, %v141
    %v143 = vrot.slane %v138, %v142
    %vm145 = vcmask 261120
    %v147 = vsel %vm145, %v131, 0
    %149 = vmatprep.subr.bf16.mxu0 0
    %150 = vmatpush1.bf16.msra.mxu0 0
    %151 = vmatprep.subr.bf16.mxu0 0
    %152 = vmatpush1.bf16.msra.mxu0 0
    %153 = vmatprep.subr.bf16.mxu0 0
    %154 = vmatpush1.bf16.msra.mxu0 0
    %155 = vmatprep.subr.bf16.mxu0 0
    %156 = vmatpush1.bf16.msra.mxu0 0
    %157 = vmatprep.subr.bf16.mxu0 0
    %158 = vmatpush1.bf16.msra.mxu0 0
    %159 = vmatprep.subr.bf16.mxu0 0
    %160 = vmatpush1.bf16.msra.mxu0 0
    %161 = vmatprep.subr.bf16.mxu0 0
    %162 = vmatpush1.bf16.msra.mxu0 %v137
    %163 = vmatprep.subr.bf16.mxu0 0
    %164 = vmatpush1.bf16.msra.mxu0 %v136
    %165 = vmatprep.subr.bf16.mxu0 0
    %166 = vmatpush2.bf16.msra.mxu0 0
    %167 = vmatprep.subr.bf16.mxu0 0
    %168 = vmatpush2.bf16.msra.mxu0 0
    %169 = vmatprep.subr.bf16.mxu0 0
    %170 = vmatpush2.bf16.msra.mxu0 0
    %171 = vmatprep.subr.bf16.mxu0 0
    %172 = vmatpush2.bf16.msra.mxu0 0
    %173 = vmatprep.subr.bf16.mxu0 0
    %174 = vmatpush2.bf16.msra.mxu0 0
    %175 = vmatprep.subr.bf16.mxu0 0
    %176 = vmatpush2.bf16.msra.mxu0 0
    %177 = vmatprep.subr.bf16.mxu0 0
    %178 = vmatpush2.bf16.msra.mxu0 0
    %179 = vmatprep.subr.bf16.mxu0 0
    %180 = vmatpush2.bf16.msra.mxu0 0
    %181 = vmatprep.mubr.bf16.mxu0 0
    %182 = vmatmul.mubr.bf16.gmra.mxu0 %v147
    %v183 = vpop.f32.mrf.mxu0
    %v184 = vadd.f32 %v143, %v183
    %v185 = vpop.f32.mrf.mxu0
    %v186 = vpop.f32.mrf.mxu0
    %v187 = vpop.f32.mrf.mxu0
    %188 = vdwg.mxu0
    %v189 = vmax.f32 %v184, 0.0
    %v190 = vpack.c.bf16 %v189, %v189
    %v191 = vld [vmem:[#allocation6] sm:$0xff]
    %v192 = vld [vmem:[#allocation6 + $0x8] sm:$0xff]
    %v193 = vld [vmem:[#allocation6 + $0x10] sm:$0xff]
    %v194 = vld [vmem:[#allocation6 + $0x18] sm:$0xff]
    %v195 = vpack.c.bf16 %v192, %v191
    %v196 = vpack.c.bf16 %v194, %v193
    %v197 = vld [vmem:[%s6] sm:$0x1]
    %v199 = vlaneseq
    %v200 = vshrl.u32 %v199, 7
    %v201 = vsub.s32 0, %v200
    %v202 = vrot.slane %v197, %v201
    %v205 = vsel %vm145, %v190, 0
    %207 = vmatprep.subr.bf16.mxu0 0
    %208 = vmatpush1.bf16.msra.mxu0 0
    %209 = vmatprep.subr.bf16.mxu0 0
    %210 = vmatpush1.bf16.msra.mxu0 0
    %211 = vmatprep.subr.bf16.mxu0 0
    %212 = vmatpush1.bf16.msra.mxu0 0
    %213 = vmatprep.subr.bf16.mxu0 0
    %214 = vmatpush1.bf16.msra.mxu0 0
    %215 = vmatprep.subr.bf16.mxu0 0
    %216 = vmatpush1.bf16.msra.mxu0 0
    %217 = vmatprep.subr.bf16.mxu0 0
    %218 = vmatpush1.bf16.msra.mxu0 0
    %219 = vmatprep.subr.bf16.mxu0 0
    %220 = vmatpush1.bf16.msra.mxu0 %v196
    %221 = vmatprep.subr.bf16.mxu0 0
    %222 = vmatpush1.bf16.msra.mxu0 %v195
    %223 = vmatprep.subr.bf16.mxu0 0
    %224 = vmatpush2.bf16.msra.mxu0 0
    %225 = vmatprep.subr.bf16.mxu0 0
    %226 = vmatpush2.bf16.msra.mxu0 0
    %227 = vmatprep.subr.bf16.mxu0 0
    %228 = vmatpush2.bf16.msra.mxu0 0
    %229 = vmatprep.subr.bf16.mxu0 0
    %230 = vmatpush2.bf16.msra.mxu0 0
    %231 = vmatprep.subr.bf16.mxu0 0
    %232 = vmatpush2.bf16.msra.mxu0 0
    %233 = vmatprep.subr.bf16.mxu0 0
    %234 = vmatpush2.bf16.msra.mxu0 0
    %235 = vmatprep.subr.bf16.mxu0 0
    %236 = vmatpush2.bf16.msra.mxu0 0
    %237 = vmatprep.subr.bf16.mxu0 0
    %238 = vmatpush2.bf16.msra.mxu0 0
    %239 = vmatprep.mubr.bf16.mxu0 0
    %240 = vmatmul.mubr.bf16.gmra.mxu0 %v205
    %v241 = vpop.f32.mrf.mxu0
    %v242 = vadd.f32 %v202, %v241
    %v243 = vpop.f32.mrf.mxu0
    %v244 = vpop.f32.mrf.mxu0
    %v245 = vpop.f32.mrf.mxu0
    %246 = vdwg.mxu0
    %v247 = vlaneseq
    %v248 = vand.u32 %v247, 127
    %vm249 = vcmp.ge.s32.totalorder %v248, 8
    %vm250 = vcmp.lt.s32.totalorder %v248, 11
    %vm251 = vmand %vm249, %vm250
    %vm252 = vcmp.ge.s32.totalorder %v248, 11
    %vm253 = vcmp.lt.s32.totalorder %v248, 16
    %vm254 = vmand %vm252, %vm253
    %v255 = vsel %vm251, 1, 0
    %vm256 = vcmp.eq.s32.totalorder %v255, 1
    %v257 = vsel %vm256, %v242, -inf
    %258 = vmax.xlane.f32.xlu0 %v257
    %v259 = vpop.xlane.xlu0 %258
    %v260 = vsel %vm254, 1, 0
    %vm261 = vcmp.eq.s32.totalorder %v260, 1
    %v262 = vsel %vm261, %v242, -inf
    %263 = vmax.xlane.f32.xlu0 %v262
    %v264 = vpop.xlane.xlu0 %263
    %v265 = vsel %vm261, %v264, %v242
    %v266 = vsel %vm256, %v259, %v265
    %v267 = vsub.f32 %v242, %v266
    %v268 = vmul.f32 %v267, 1.442695
    %v269 = vpow.pop %v268
    %v270 = vsel %vm256, %v269, 0.0
    %271 = vadd.xlane.f32.xlu0 %v270
    %v272 = vpop.xlane.xlu0 %271
    %v273 = vsel %vm261, %v269, 0.0
    %274 = vadd.xlane.f32.xlu0 %v273
    %v275 = vpop.xlane.xlu0 %274
    %v276 = vrcp.pop %v272
    %v277 = vmul.f32 %v272, %v276
    %v278 = vsub.f32 2.0, %v277
    %v279 = vmul.f32 %v276, %v278
    %v280 = vrcp.pop %v275
    %v281 = vmul.f32 %v275, %v280
    %v282 = vsub.f32 2.0, %v281
    %v283 = vmul.f32 %v280, %v282
    %vm284 = vcmp.lt.s32.totalorder %v248, 8
    %v285 = vmul.f32 %v269, %v279
    %v286 = vmul.f32 %v269, %v283
    %v287 = vsel %vm261, %v286, 0.0
    %v288 = vsel %vm256, %v285, %v287
    %v289 = vsel %vm284, 1, 0
    %vm290 = vcmp.eq.s32.totalorder %v289, 1
    %v291 = vsel %vm290, %v242, %v288
    %292 = vst [vmem:[%s7] sm:$0xff] %v291
    // Predicated region
    $region42: #{generator_forward.1} parent=1 // pred_check
      _
    $region43: #{generator_forward.1} parent=1 // pred_check_branch
      %294 = sbr.rel (0) target = $region45
    $region44: #{generator_forward.1} parent=1 // pred_region
      _
    $region45: #{generator_forward.1} parent=1 // pred_fallthru
      _
    // Predicated region
    $region46: #{generator_forward.1} parent=1 // pred_check
      _
    $region47: #{generator_forward.1} parent=1 // pred_check_branch
      %296 = sbr.rel (0) target = $region49
    $region48: #{generator_forward.1} parent=1 // pred_region
      _
    $region49: #{generator_forward.1} parent=1 // pred_fallthru
      _
    %297 = vsyncpa [#allocation3], 1
    %298 = vsyncpa [#allocation5], 1

</llo_original>
